<compile_context>
chip_gen: v5e
topology: v5e:2x2
jax: 0.10.0
libtpu: 0.0.40
codegen_flags: <defaults>
</compile_context>

<pallas_src>
import functools

import jax
import jax.numpy as jnp
from jax import lax
from jax.experimental import pallas as pl
from jax.experimental.pallas import tpu as pltpu


def _distri_mse_kernel(m1_ref, lv1_ref, m2_ref, lv2_ref, out_ref,
                       *, fr, tf, steps_per_seg, need_mask):
    """Accumulates per-row sums of ((dlv^2 + dm^2)/2) over feature tiles.

    out_ref is a (Br, 1) f32 accumulator resident across the inner grid axis.
    """
    k = pl.program_id(1)           # reduction step within this segment

    @pl.when(k == 0)
    def _():
        out_ref[...] = jnp.zeros_like(out_ref)

    # Upcast after the (native-dtype) load; accumulate in f32.
    dm = m1_ref[...].astype(jnp.float32) - m2_ref[...].astype(jnp.float32)
    dlv = lv1_ref[...].astype(jnp.float32) - lv2_ref[...].astype(jnp.float32)
    res = (dlv * dlv + dm * dm) * 0.5            # (Br, tf) elementwise on VPU

    if need_mask:
        # Tail tile: zero out lanes past the real feature extent.
        seg = pl.program_id(0)
        global_step = seg * steps_per_seg + k
        col = lax.broadcasted_iota(jnp.int32, res.shape, 1) + global_step * tf
        res = jnp.where(col < fr, res, 0.0)

    out_ref[...] += jnp.sum(res, axis=1, keepdims=True)   # XLU cross-lane reduce


def _per_sample_loss(mean1, logvar1, mean2, logvar2, tile_f=None):
    """Per-sample loss vector of shape (B,), computed by a Pallas kernel."""
    assert mean1.shape == logvar1.shape == mean2.shape == logvar2.shape
    B = mean1.shape[0]
    F = 1
    for d in mean1.shape[1:]:
        F *= d

    # Pack up to 8 rows per sample into the sublane axis so (8,128) vregs are
    # fully occupied for small batch sizes.
    R = 1
    for cand in (8, 4, 2):
        if F % cand == 0:
            R = cand
            break
    Br = B * R
    Fr = F // R

    # Native dtype straight into the kernel (no wrapper f32 copies -> no extra
    # HBM round trip).
    m1 = mean1.reshape(Br, Fr)
    lv1 = logvar1.reshape(Br, Fr)
    m2 = mean2.reshape(Br, Fr)
    lv2 = logvar2.reshape(Br, Fr)

    # Feature-axis tile: ~2 MiB per input block. 4 inputs x 2 buffers x block
    # stays well under the scoped VMEM default on every generation (incl. v7x).
    if tile_f is not None:
        tf = tile_f
    else:
        itemsize = max(x.dtype.itemsize for x in (m1, lv1, m2, lv2))
        target_block_bytes = 2 * 1024 * 1024
        tf = (target_block_bytes // (Br * itemsize)) // 128 * 128
        tf = max(tf, 128)

    if tf >= Fr:
        tf = Fr                      # full feature extent fits one block
        steps = 1
        need_mask = False
    else:
        steps = pl.cdiv(Fr, tf)      # tf is a multiple of 128 here
        need_mask = (Fr % tf) != 0

    # Leading 'parallel' axis: split the reduction steps into independent
    # segments with separate partial sums (lets both v7x TCs stream; no-op on
    # single-TC v5e/v6e).
    nseg = 2 if (steps >= 4 and steps % 2 == 0) else 1
    steps_per_seg = steps // nseg

    kernel = functools.partial(
        _distri_mse_kernel,
        fr=Fr, tf=tf, steps_per_seg=steps_per_seg, need_mask=need_mask)

    in_spec = pl.BlockSpec((Br, tf), lambda s, k: (0, s * steps_per_seg + k))
    out_spec = pl.BlockSpec((pl.Squeezed(), Br, 1), lambda s, k: (s, 0, 0))

    partial_sums = pl.pallas_call(
        kernel,
        out_shape=jax.ShapeDtypeStruct((nseg, Br, 1), jnp.float32),
        grid=(nseg, steps_per_seg),
        in_specs=[in_spec, in_spec, in_spec, in_spec],
        out_specs=out_spec,
        compiler_params=pltpu.CompilerParams(
            dimension_semantics=("parallel", "arbitrary")),
    )(m1, lv1, m2, lv2)

    # Finish: combine segment/row partial sums, then one division by F (the
    # per-sample mean over all non-batch dims).
    per_sample_sum = partial_sums.reshape(nseg, B, R).sum(axis=(0, 2))
    return per_sample_sum / jnp.float32(F)


def distri_mse_loss(mean1, logvar1, mean2, logvar2, reduction="mean",
                    tile_f=None):
    if mean1.ndim > 1:
        res = _per_sample_loss(mean1, logvar1, mean2, logvar2, tile_f=tile_f)
    else:
        # 1-D inputs: no per-sample reduction in the reference module (tiny,
        # plain JAX).
        d1 = logvar1.astype(jnp.float32) - logvar2.astype(jnp.float32)
        d2 = mean1.astype(jnp.float32) - mean2.astype(jnp.float32)
        res = (d1 * d1 + d2 * d2) * 0.5
    if reduction == "sum":
        return jnp.sum(res)
    elif reduction == "mean":
        return jnp.mean(res)
    else:
        return res


def _ref_loss(mean1, logvar1, mean2, logvar2, reduction="mean"):
    """Pure-JAX reference (f32)."""
    res = ((logvar1.astype(jnp.float32) - logvar2.astype(jnp.float32)) ** 2
           + (mean1.astype(jnp.float32) - mean2.astype(jnp.float32)) ** 2) / 2.0
    if res.ndim > 1:
        res = res.reshape(res.shape[0], -1).mean(axis=1)
    if reduction == "sum":
        return jnp.sum(res)
    elif reduction == "mean":
        return jnp.mean(res)
    return res


if __name__ == "__main__":
    key = jax.random.PRNGKey(0)
    k1, k2, k3, k4 = jax.random.split(key, 4)
    B, C, H, W = 2, 4, 16, 16                     # NCHW, small shapes
    mean1 = jax.random.normal(k1, (B, C, H, W), dtype=jnp.float32)
    logvar1 = jax.random.normal(k2, (B, C, H, W), dtype=jnp.float32)
    mean2 = jax.random.normal(k3, (B, C, H, W), dtype=jnp.float32)
    logvar2 = jax.random.normal(k4, (B, C, H, W), dtype=jnp.float32)

    # Main path: f32, single-tile.
    loss = distri_mse_loss(mean1, logvar1, mean2, logvar2, reduction="mean")
    loss = jax.block_until_ready(loss)
    ref = _ref_loss(mean1, logvar1, mean2, logvar2, "mean")
    assert jnp.allclose(loss, ref, rtol=1e-5, atol=1e-6), (loss, ref)

    # 'sum' and 'none' reductions.
    s = jax.block_until_ready(distri_mse_loss(mean1, logvar1, mean2, logvar2, "sum"))
    assert jnp.allclose(s, _ref_loss(mean1, logvar1, mean2, logvar2, "sum"),
                        rtol=1e-5, atol=1e-6)
    n = jax.block_until_ready(distri_mse_loss(mean1, logvar1, mean2, logvar2, "none"))
    assert jnp.allclose(n, _ref_loss(mean1, logvar1, mean2, logvar2, "none"),
                        rtol=1e-5, atol=1e-6)

    # bf16 inputs: no wrapper cast, upcast happens in-kernel.
    to_bf16 = lambda x: x.astype(jnp.bfloat16)
    loss_bf16 = jax.block_until_ready(
        distri_mse_loss(to_bf16(mean1), to_bf16(logvar1),
                        to_bf16(mean2), to_bf16(logvar2), "mean"))
    ref_bf16 = _ref_loss(to_bf16(mean1), to_bf16(logvar1),
                         to_bf16(mean2), to_bf16(logvar2), "mean")
    assert jnp.allclose(loss_bf16, ref_bf16, rtol=2e-2, atol=1e-3)

    # Tiled + masked-tail path (forced small tile, Fr=160 not a multiple of 128).
    k5, k6, k7, k8 = jax.random.split(jax.random.PRNGKey(1), 4)
    a1 = jax.random.normal(k5, (2, 4, 16, 20), dtype=jnp.float32)
    b1 = jax.random.normal(k6, (2, 4, 16, 20), dtype=jnp.float32)
    a2 = jax.random.normal(k7, (2, 4, 16, 20), dtype=jnp.float32)
    b2 = jax.random.normal(k8, (2, 4, 16, 20), dtype=jnp.float32)
    n_tiled = jax.block_until_ready(
        distri_mse_loss(a1, b1, a2, b2, "none", tile_f=128))
    assert jnp.allclose(n_tiled, _ref_loss(a1, b1, a2, b2, "none"),
                        rtol=1e-5, atol=1e-6)

    # Tiled + 2-segment 'parallel' path (forced small tile, Fr=512 -> 4 steps).
    k9, k10, k11, k12 = jax.random.split(jax.random.PRNGKey(2), 4)
    c1 = jax.random.normal(k9, (2, 4, 32, 32), dtype=jnp.float32)
    d1 = jax.random.normal(k10, (2, 4, 32, 32), dtype=jnp.float32)
    c2 = jax.random.normal(k11, (2, 4, 32, 32), dtype=jnp.float32)
    d2 = jax.random.normal(k12, (2, 4, 32, 32), dtype=jnp.float32)
    n_seg = jax.block_until_ready(
        distri_mse_loss(c1, d1, c2, d2, "none", tile_f=128))
    assert jnp.allclose(n_seg, _ref_loss(c1, d1, c2, d2, "none"),
                        rtol=1e-5, atol=1e-6)

    print("KERNEL_OK")
</pallas_src>

<mosaic_0001>
module attributes {stable_mosaic.version = 11 : i64} {
  func.func @_distri_mse_kernel(%arg0: i32, %arg1: i32, %arg2: memref<16x128xf32, #tpu.memory_space<vmem>>, %arg3: memref<16x128xf32, #tpu.memory_space<vmem>>, %arg4: memref<16x128xf32, #tpu.memory_space<vmem>>, %arg5: memref<16x128xf32, #tpu.memory_space<vmem>>, %arg6: memref<1x16x1xf32, #tpu.memory_space<vmem>>) attributes {dimension_semantics = [#tpu.dimension_semantics<parallel>, #tpu.dimension_semantics<arbitrary>], iteration_bounds = array<i64: 1, 1>, scalar_prefetch = 0 : i64, scratch_operands = 0 : i64, tpu.core_type = #tpu.core_type<tc>, window_params = [{transform_indices = @transform_0, window_bounds = array<i64: 16, 128>}, {transform_indices = @transform_1, window_bounds = array<i64: 16, 128>}, {transform_indices = @transform_2, window_bounds = array<i64: 16, 128>}, {transform_indices = @transform_3, window_bounds = array<i64: 16, 128>}, {transform_indices = @transform_4, window_bounds = array<i64: 1, 16, 1>}]} {
    %c0_i32 = arith.constant 0 : i32
    %0 = arith.cmpi eq, %arg1, %c0_i32 : i32
    %1 = arith.extui %0 : i1 to i32
    %c0_i32_0 = arith.constant 0 : i32
    %2 = arith.cmpi ne, %1, %c0_i32_0 : i32
    scf.if %2 {
      %cst_15 = arith.constant 0.000000e+00 : f32
      %22 = vector.broadcast %cst_15 : f32 to vector<16x1xf32>
      %c0_16 = arith.constant 0 : index
      %c0_17 = arith.constant 0 : index
      %c0_18 = arith.constant 0 : index
      %23 = vector.load %arg6[%c0_16, %c0_17, %c0_18] : memref<1x16x1xf32, #tpu.memory_space<vmem>>, vector<1x16x1xf32>
      %24 = vector.shape_cast %23 : vector<1x16x1xf32> to vector<16x1xf32>
      %25 = vector.shape_cast %22 : vector<16x1xf32> to vector<1x16x1xf32>
      tpu.vector_store %arg6[%c0_16, %c0_17, %c0_18], %25 {strides = array<i32>} : memref<1x16x1xf32, #tpu.memory_space<vmem>>, vector<1x16x1xf32>,
    } else {
    }
    %c0 = arith.constant 0 : index
    %c0_1 = arith.constant 0 : index
    %3 = vector.load %arg2[%c0, %c0_1] : memref<16x128xf32, #tpu.memory_space<vmem>>, vector<16x128xf32>
    %c0_2 = arith.constant 0 : index
    %c0_3 = arith.constant 0 : index
    %4 = vector.load %arg4[%c0_2, %c0_3] : memref<16x128xf32, #tpu.memory_space<vmem>>, vector<16x128xf32>
    %5 = arith.subf %3, %4 : vector<16x128xf32>
    %c0_4 = arith.constant 0 : index
    %c0_5 = arith.constant 0 : index
    %6 = vector.load %arg3[%c0_4, %c0_5] : memref<16x128xf32, #tpu.memory_space<vmem>>, vector<16x128xf32>
    %c0_6 = arith.constant 0 : index
    %c0_7 = arith.constant 0 : index
    %7 = vector.load %arg5[%c0_6, %c0_7] : memref<16x128xf32, #tpu.memory_space<vmem>>, vector<16x128xf32>
    %8 = arith.subf %6, %7 : vector<16x128xf32>
    %9 = arith.mulf %8, %8 : vector<16x128xf32>
    %10 = arith.mulf %5, %5 : vector<16x128xf32>
    %11 = arith.addf %9, %10 : vector<16x128xf32>
    %cst = arith.constant 5.000000e-01 : f32
    %12 = vector.broadcast %cst : f32 to vector<16x128xf32>
    %13 = arith.mulf %11, %12 : vector<16x128xf32>
    %c0_8 = arith.constant 0 : index
    %c0_9 = arith.constant 0 : index
    %c0_10 = arith.constant 0 : index
    %14 = vector.load %arg6[%c0_8, %c0_9, %c0_10] : memref<1x16x1xf32, #tpu.memory_space<vmem>>, vector<1x16x1xf32>
    %15 = vector.shape_cast %14 : vector<1x16x1xf32> to vector<16x1xf32>
    %cst_11 = arith.constant dense<0.000000e+00> : vector<16xf32>
    %16 = vector.multi_reduction <add>, %13, %cst_11 [1] : vector<16x128xf32> to vector<16xf32>
    %17 = vector.shape_cast %16 : vector<16xf32> to vector<16x1xf32>
    %18 = arith.addf %15, %17 : vector<16x1xf32>
    %c0_12 = arith.constant 0 : index
    %c0_13 = arith.constant 0 : index
    %c0_14 = arith.constant 0 : index
    %19 = vector.load %arg6[%c0_12, %c0_13, %c0_14] : memref<1x16x1xf32, #tpu.memory_space<vmem>>, vector<1x16x1xf32>
    %20 = vector.shape_cast %19 : vector<1x16x1xf32> to vector<16x1xf32>
    %21 = vector.shape_cast %18 : vector<16x1xf32> to vector<1x16x1xf32>
    tpu.vector_store %arg6[%c0_12, %c0_13, %c0_14], %21 {strides = array<i32>} : memref<1x16x1xf32, #tpu.memory_space<vmem>>, vector<1x16x1xf32>,
    return
  }
  func.func @transform_0(%arg0: i32, %arg1: i32) -> (i32, i32) {
    %c1_i32 = arith.constant 1 : i32
    %0 = arith.muli %arg0, %c1_i32 : i32
    %1 = arith.addi %0, %arg1 : i32
    %c0_i32 = arith.constant 0 : i32
    %c0_i32_0 = arith.constant 0 : i32
    return %c0_i32, %1 : i32, i32
  }
  func.func @transform_1(%arg0: i32, %arg1: i32) -> (i32, i32) {
    %c1_i32 = arith.constant 1 : i32
    %0 = arith.muli %arg0, %c1_i32 : i32
    %1 = arith.addi %0, %arg1 : i32
    %c0_i32 = arith.constant 0 : i32
    %c0_i32_0 = arith.constant 0 : i32
    return %c0_i32, %1 : i32, i32
  }
  func.func @transform_2(%arg0: i32, %arg1: i32) -> (i32, i32) {
    %c1_i32 = arith.constant 1 : i32
    %0 = arith.muli %arg0, %c1_i32 : i32
    %1 = arith.addi %0, %arg1 : i32
    %c0_i32 = arith.constant 0 : i32
    %c0_i32_0 = arith.constant 0 : i32
    return %c0_i32, %1 : i32, i32
  }
  func.func @transform_3(%arg0: i32, %arg1: i32) -> (i32, i32) {
    %c1_i32 = arith.constant 1 : i32
    %0 = arith.muli %arg0, %c1_i32 : i32
    %1 = arith.addi %0, %arg1 : i32
    %c0_i32 = arith.constant 0 : i32
    %c0_i32_0 = arith.constant 0 : i32
    return %c0_i32, %1 : i32, i32
  }
  func.func @transform_4(%arg0: i32, %arg1: i32) -> (i32, i32, i32) {
    %c0_i32 = arith.constant 0 : i32
    %c0_i32_0 = arith.constant 0 : i32
    %c0_i32_1 = arith.constant 0 : i32
    return %arg0, %c0_i32, %c0_i32_0 : i32, i32, i32
  }
}

</mosaic_0001>

<llo_original>
// kernel: tpu_custom_call.1
$region0: #{tpu_custom_call.1}
  #allocation0 [shape = 'u32[]', space=smem, size = 0x4, offset = 0x4, fixed_abs, tag = 'smem constant byte address 0x4 - core index']
  #allocation1 [shape = 'u32[72,128]{1,0:T(1,128)}', space=vmem, size = 0x9000, scoped, tag = 'internal scratch']
  %s0 = inlined_call_operand.hbm [shape: f32[16,128], index: 0, kind: input, shape index: {}]
  %s1 = inlined_call_operand.hbm [shape: f32[16,128], index: 1, kind: input, shape index: {}]
  %s2 = inlined_call_operand.hbm [shape: f32[16,128], index: 2, kind: input, shape index: {}]
  %s3 = inlined_call_operand.hbm [shape: f32[16,128], index: 3, kind: input, shape index: {}]
  %s4 = inlined_call_operand.vmem [shape: f32[1,16,1], index: 4, kind: output, shape index: {}]
  %s5 = sld [smem:[#allocation0]]
  $region46: #{tpu_custom_call.1} parent=0
    _
  %s7 = ssub.s32 1, %s5
  %s8 = scalar_select 0, %s7, %s5
  $region1: #{tpu_custom_call.1} parent=0
    #allocation2 [shape = 'u8[8192]{0}', space=vmem, size = 0x2000, scoped, tag = 'input window, operand 0, single buffered']
    #allocation3 [shape = 's32[1]{0}', space=sflag, size = 0x4, scoped, tag = 'scoped memory for tpu_custom_call.1']
    #allocation4 [shape = 'u8[8192]{0}', space=vmem, size = 0x2000, scoped, tag = 'input window, operand 1, single buffered']
    #allocation5 [shape = 's32[1]{0}', space=sflag, size = 0x4, scoped, tag = 'scoped memory for tpu_custom_call.1']
    #allocation6 [shape = 'u8[8192]{0}', space=vmem, size = 0x2000, scoped, tag = 'input window, operand 2, single buffered']
    #allocation7 [shape = 'u8[8192]{0}', space=vmem, size = 0x2000, scoped, tag = 'input window, operand 3, single buffered']
    #allocation8 [shape = 's32[1]{0}', space=sflag, size = 0x4, scoped, tag = 'scoped memory for tpu_custom_call.1']
    %9 = vsyncpa [#allocation3], 0
    %10 = vsyncpa [#allocation5], 0
    %11 = vsyncpa [#allocation8], 0
    // Predicated region
    $region2: #{tpu_custom_call.1} parent=1 // pred_check
      _
    $region3: #{tpu_custom_call.1} parent=1 // pred_check_branch
      %13 = sbr.rel (0) target = $region5
    $region4: #{tpu_custom_call.1} parent=1 // pred_region
      %s14 = sadd.s32 0, 0
      %16 = vsyncadd [#allocation3], 0
      %s17 = smul.addr %s14, 8
      %s18 = scalar_lea.hbm %s0, %s17
      %s19 = sshll.u32 %s18, 4
      %s20 = int_to_ptr.hbm [resolvable:$true] %s19
      %s21 = sshll.u32 [#allocation2], 4
      %s22 = int_to_ptr.vmem [resolvable:$true] %s21
      %27 = dma.hbm_to_vmem [thread:$0]  %s20, 256, %s22, [#allocation3], 128, 128, 8
    $region5: #{tpu_custom_call.1} parent=1 // pred_fallthru
      _
    // Predicated region
    $region6: #{tpu_custom_call.1} parent=1 // pred_check
      _
    $region7: #{tpu_custom_call.1} parent=1 // pred_check_branch
      %29 = sbr.rel (0) target = $region9
    $region8: #{tpu_custom_call.1} parent=1 // pred_region
      %s30 = sadd.s32 0, 0
      %32 = vsyncadd [#allocation5], 0
      %s33 = smul.addr %s30, 8
      %s34 = scalar_lea.hbm %s1, %s33
      %s35 = sshll.u32 %s34, 4
      %s36 = int_to_ptr.hbm [resolvable:$true] %s35
      %s37 = sshll.u32 [#allocation4], 4
      %s38 = int_to_ptr.vmem [resolvable:$true] %s37
      %43 = dma.hbm_to_vmem [thread:$0]  %s36, 256, %s38, [#allocation5], 128, 128, 8
    $region9: #{tpu_custom_call.1} parent=1 // pred_fallthru
      _
    // Predicated region
    $region10: #{tpu_custom_call.1} parent=1 // pred_check
      _
    $region11: #{tpu_custom_call.1} parent=1 // pred_check_branch
      %45 = sbr.rel (0) target = $region13
    $region12: #{tpu_custom_call.1} parent=1 // pred_region
      %s46 = sadd.s32 0, 0
      %48 = vsyncadd [#allocation5], 0
      %s49 = smul.addr %s46, 8
      %s50 = scalar_lea.hbm %s2, %s49
      %s51 = sshll.u32 %s50, 4
      %s52 = int_to_ptr.hbm [resolvable:$true] %s51
      %s53 = sshll.u32 [#allocation6], 4
      %s54 = int_to_ptr.vmem [resolvable:$true] %s53
      %59 = dma.hbm_to_vmem [thread:$0]  %s52, 256, %s54, [#allocation5], 128, 128, 8
    $region13: #{tpu_custom_call.1} parent=1 // pred_fallthru
      _
    // Predicated region
    $region14: #{tpu_custom_call.1} parent=1 // pred_check
      _
    $region15: #{tpu_custom_call.1} parent=1 // pred_check_branch
      %61 = sbr.rel (0) target = $region17
    $region16: #{tpu_custom_call.1} parent=1 // pred_region
      %s62 = sadd.s32 0, 0
      %64 = vsyncadd [#allocation8], 0
      %s65 = smul.addr %s62, 8
      %s66 = scalar_lea.hbm %s3, %s65
      %s67 = sshll.u32 %s66, 4
      %s68 = int_to_ptr.hbm [resolvable:$true] %s67
      %s69 = sshll.u32 [#allocation7], 4
      %s70 = int_to_ptr.vmem [resolvable:$true] %s69
      %75 = dma.hbm_to_vmem [thread:$0]  %s68, 256, %s70, [#allocation8], 128, 128, 8
    $region17: #{tpu_custom_call.1} parent=1 // pred_fallthru
      _
    // Predicated region
    $region18: #{tpu_custom_call.1} parent=1 // pred_check
      _
    $region19: #{tpu_custom_call.1} parent=1 // pred_check_branch
      %77 = sbr.rel (0) target = $region21
    $region20: #{tpu_custom_call.1} parent=1 // pred_region
      %79 = dma.done [#allocation3], 256
    $region21: #{tpu_custom_call.1} parent=1 // pred_fallthru
      _
    // Predicated region
    $region22: #{tpu_custom_call.1} parent=1 // pred_check
      _
    $region23: #{tpu_custom_call.1} parent=1 // pred_check_branch
      %81 = sbr.rel (0) target = $region25
    $region24: #{tpu_custom_call.1} parent=1 // pred_region
      %83 = dma.done [#allocation5], 256
    $region25: #{tpu_custom_call.1} parent=1 // pred_fallthru
      _
    // Predicated region
    $region26: #{tpu_custom_call.1} parent=1 // pred_check
      _
    $region27: #{tpu_custom_call.1} parent=1 // pred_check_branch
      %85 = sbr.rel (0) target = $region29
    $region28: #{tpu_custom_call.1} parent=1 // pred_region
      %87 = dma.done [#allocation5], 256
    $region29: #{tpu_custom_call.1} parent=1 // pred_fallthru
      _
    // Predicated region
    $region30: #{tpu_custom_call.1} parent=1 // pred_check
      _
    $region31: #{tpu_custom_call.1} parent=1 // pred_check_branch
      %89 = sbr.rel (0) target = $region33
    $region32: #{tpu_custom_call.1} parent=1 // pred_region
      %91 = dma.done [#allocation8], 256
    $region33: #{tpu_custom_call.1} parent=1 // pred_fallthru
      _
    %s92 = sadd.s32 0, 0
    %s93 = sadd.s32 0, 0
    %s94 = sadd.s32 0, 0
    %s95 = sadd.s32 0, 0
    %p96 = scmp.eq.s32.totalorder 0, 0
    // Predicated region
    $region34: #{tpu_custom_call.1} parent=1 // pred_check
      %p97 = pneg %p96
    $region35: #{tpu_custom_call.1} parent=1 // pred_check_branch
      %99 = sbr.rel (%p97) target = $region37
    $region36: #{tpu_custom_call.1} parent=1 // pred_region
      %vm100 = vcmask 7168
      %101 = vst.msk [vmem:[%s4] sm:$0xff] %vm100, 0.0
      %102 = vst.msk [vmem:[%s4 + $0x8] sm:$0xff] %vm100, 0.0
    $region37: #{tpu_custom_call.1} parent=1 // pred_fallthru
      _
    %v103 = vld [vmem:[#allocation2] sm:$0xff]
    %v104 = vld [vmem:[#allocation2 + $0x8] sm:$0xff]
    %v105 = vld [vmem:[#allocation6] sm:$0xff]
    %v106 = vld [vmem:[#allocation6 + $0x8] sm:$0xff]
    %v107 = vsub.f32 %v103, %v105
    %v108 = vsub.f32 %v104, %v106
    %v109 = vld [vmem:[#allocation4] sm:$0xff]
    %v110 = vld [vmem:[#allocation4 + $0x8] sm:$0xff]
    %v111 = vld [vmem:[#allocation7] sm:$0xff]
    %v112 = vld [vmem:[#allocation7 + $0x8] sm:$0xff]
    %v113 = vsub.f32 %v109, %v111
    %v114 = vsub.f32 %v110, %v112
    %v115 = vmul.f32 %v113, %v113
    %v116 = vmul.f32 %v114, %v114
    %v117 = vmul.f32 %v107, %v107
    %v118 = vmul.f32 %v108, %v108
    %v119 = vadd.f32 %v115, %v117
    %v120 = vadd.f32 %v116, %v118
    %v121 = vmul.f32 %v119, 0.5
    %v122 = vmul.f32 %v120, 0.5
    %v123 = vld [vmem:[%s4] sm:$0xff]
    %v124 = vld [vmem:[%s4 + $0x8] sm:$0xff]
    %125 = vadd.xlane.f32.xlu0 %v121
    %v126 = vpop.xlane.xlu0 %125
    %127 = vadd.xlane.f32.xlu0 %v122
    %v128 = vpop.xlane.xlu0 %127
    %v129 = vadd.f32 %v123, %v126
    %v130 = vadd.f32 %v124, %v128
    %vm131 = vcmask 7168
    %132 = vst.msk [vmem:[%s4] sm:$0xff] %vm131, %v129
    %133 = vst.msk [vmem:[%s4 + $0x8] sm:$0xff] %vm131, %v130
    // Predicated region
    $region38: #{tpu_custom_call.1} parent=1 // pred_check
      _
    $region39: #{tpu_custom_call.1} parent=1 // pred_check_branch
      %135 = sbr.rel (0) target = $region41
    $region40: #{tpu_custom_call.1} parent=1 // pred_region
      _
    $region41: #{tpu_custom_call.1} parent=1 // pred_fallthru
      _
    // Predicated region
    $region42: #{tpu_custom_call.1} parent=1 // pred_check
      _
    $region43: #{tpu_custom_call.1} parent=1 // pred_check_branch
      %137 = sbr.rel (0) target = $region45
    $region44: #{tpu_custom_call.1} parent=1 // pred_region
      _
    $region45: #{tpu_custom_call.1} parent=1 // pred_fallthru
      _
    %138 = vsyncpa [#allocation3], 1
    %139 = vsyncpa [#allocation5], 1
    %140 = vsyncpa [#allocation8], 1

</llo_original>
